<compile_context>
chip_gen: v7x
topology: tpu7x:2x2x1
jax: 0.10.0
libtpu: 0.0.40
codegen_flags: <defaults>
</compile_context>

<pallas_src>
import functools

import jax
import jax.numpy as jnp
from jax.experimental import pallas as pl
from jax.experimental.pallas import tpu as pltpu

# Problem sizes (small, consistent with an audio (B, C, T) batch).
B = 2          # batch
C = 4          # channels
T = 256        # num_samples (multiple of 128 -> lane-dense output)
L_IR = 16      # impulse-response length


def _rir_kernel(ir_ref, x_ref, o_ref, *, ir_len, t_len, w_pad):
    """Single grid step over the whole (B*C, T) slab.

    ir_ref : VMEM (BC, ir_len)  time-REVERSED IRs, one row per (b, c) row
    x_ref  : VMEM (BC, w_pad)   left-zero-padded, lane-aligned input slab
    o_ref  : VMEM (BC, t_len)
    """
    x = x_ref[...]                                    # one VMEM load of the slab
    # y[t] = sum_j ir_rev[j] * x_pad[t + j]; left-shift by j via an XLU roll
    # (left zero padding guarantees t + j never wraps into garbage for t < T).
    acc = ir_ref[:, 0:1] * x[:, :t_len]               # tap j = 0: no roll needed
    for j in range(1, ir_len):                        # static unroll, 15 taps
        shifted = pltpu.roll(x, shift=w_pad - j, axis=1)[:, :t_len]
        acc = acc + ir_ref[:, j:j + 1] * shifted      # per-row scalar * vector (VPU)
    o_ref[...] = acc.astype(o_ref.dtype)


def add_rir(x, ir):
    """x: (B, C, T) float32, ir: (B, L_IR) float32 -> (B, C, T) float32."""
    b, c, t = x.shape
    l_ir = ir.shape[-1]
    bc = b * c

    # Collapse batch & channel into the sublane axis; time stays on lanes.
    x2 = x.reshape(bc, t)
    # Left-pad (causal halo) and right-pad up to a multiple of 128 lanes so the
    # input block is lane-dense.  (Wrapper pad is fine at this size; at real
    # audio lengths handle the halo in-kernel / per time tile instead.)
    w_raw = t + l_ir - 1
    w_pad = ((w_raw + 127) // 128) * 128
    x_pad = jnp.pad(x2, ((0, 0), (l_ir - 1, w_pad - w_raw)))

    # Reversed IR, replicated per channel so row r = b*C + c gets ir[b].
    ir_rows = jnp.repeat(ir[:, ::-1].astype(jnp.float32), c, axis=0)  # (bc, l_ir)

    kernel = functools.partial(_rir_kernel, ir_len=l_ir, t_len=t, w_pad=w_pad)

    out = pl.pallas_call(
        kernel,
        out_shape=jax.ShapeDtypeStruct((bc, t), x.dtype),
        grid_spec=pltpu.PrefetchScalarGridSpec(
            num_scalar_prefetch=0,
            grid=(1,),  # whole problem fits one sublane-dense step
            in_specs=[
                pl.BlockSpec((bc, l_ir), lambda i: (0, 0)),   # full-array block
                pl.BlockSpec((bc, w_pad), lambda i: (0, 0)),  # lane-dense input
            ],
            out_specs=pl.BlockSpec((bc, t), lambda i: (0, 0)),  # lane-dense output
        ),
        compiler_params=pltpu.CompilerParams(
            dimension_semantics=("arbitrary",),
        ),
    )(ir_rows, x_pad)
    return out.reshape(b, c, t)


def _reference(x, ir):
    """Pure-JAX reference: per-example full conv, truncated to T."""
    def one(xb, irb):                              # xb: (C, T), irb: (L,)
        def one_ch(xc):
            return jnp.convolve(xc, irb, mode="full")[: xc.shape[0]]
        return jax.vmap(one_ch)(xb)
    return jax.vmap(one)(x, ir)


def _make_synthetic_rirs(key, batch, length):
    """Deterministic synthetic room impulse responses: decaying noise with a
    unit direct-path tap at t=0 (stand-in for loading rir_paths files)."""
    noise = jax.random.normal(key, (batch, length), dtype=jnp.float32)
    decay = jnp.exp(-jnp.arange(length, dtype=jnp.float32) / 4.0)
    ir = 0.3 * noise * decay[None, :]
    ir = ir.at[:, 0].set(1.0)
    return ir


if __name__ == "__main__":
    key = jax.random.PRNGKey(0)
    kx, kir = jax.random.split(key)
    x = jax.random.normal(kx, (B, C, T), dtype=jnp.float32)
    ir = _make_synthetic_rirs(kir, B, L_IR)

    y = jax.block_until_ready(add_rir(x, ir))

    y_ref = _reference(x, ir)
    assert y.shape == x.shape and y.dtype == x.dtype
    err = float(jnp.max(jnp.abs(y - y_ref)))
    assert err < 1e-4, err
    print("KERNEL_OK")
</pallas_src>

<mosaic_0001>
module attributes {stable_mosaic.version = 11 : i64} {
  func.func @_rir_kernel(%arg0: i32, %arg1: memref<8x16xf32, #tpu.memory_space<vmem>>, %arg2: memref<8x384xf32, #tpu.memory_space<vmem>>, %arg3: memref<8x256xf32, #tpu.memory_space<vmem>>) attributes {dimension_semantics = [#tpu.dimension_semantics<arbitrary>], iteration_bounds = array<i64: 1>, scalar_prefetch = 0 : i64, scratch_operands = 0 : i64, tpu.core_type = #tpu.core_type<tc>, window_params = [{pipeline_mode = #tpu.pipeline_mode<synchronous>, transform_indices = @transform_0, window_bounds = array<i64: 8, 16>}, {pipeline_mode = #tpu.pipeline_mode<synchronous>, transform_indices = @transform_1, window_bounds = array<i64: 8, 384>}, {pipeline_mode = #tpu.pipeline_mode<synchronous>, transform_indices = @transform_2, window_bounds = array<i64: 8, 256>}]} {
    %c0 = arith.constant 0 : index
    %c0_0 = arith.constant 0 : index
    %0 = vector.load %arg2[%c0, %c0_0] : memref<8x384xf32, #tpu.memory_space<vmem>>, vector<8x384xf32>
    %c0_1 = arith.constant 0 : index
    %c0_2 = arith.constant 0 : index
    %1 = vector.load %arg1[%c0_1, %c0_2] : memref<8x16xf32, #tpu.memory_space<vmem>>, vector<8x1xf32>
    %2 = vector.extract_strided_slice %0 {offsets = [0, 0], sizes = [8, 256], strides = [1, 1]} : vector<8x384xf32> to vector<8x256xf32>
    %3 = vector.broadcast %1 : vector<8x1xf32> to vector<8x256xf32>
    %4 = arith.mulf %3, %2 : vector<8x256xf32>
    %c383_i32 = arith.constant 383 : i32
    %5 = tpu.dynamic_rotate %0 by %c383_i32 dim 1 : vector<8x384xf32>, i32 -> vector<8x384xf32>
    %6 = vector.extract_strided_slice %5 {offsets = [0, 0], sizes = [8, 256], strides = [1, 1]} : vector<8x384xf32> to vector<8x256xf32>
    %c0_3 = arith.constant 0 : index
    %c1 = arith.constant 1 : index
    %7 = vector.load %arg1[%c0_3, %c1] : memref<8x16xf32, #tpu.memory_space<vmem>>, vector<8x1xf32>
    %8 = vector.broadcast %7 : vector<8x1xf32> to vector<8x256xf32>
    %9 = arith.mulf %8, %6 : vector<8x256xf32>
    %10 = arith.addf %4, %9 : vector<8x256xf32>
    %c382_i32 = arith.constant 382 : i32
    %11 = tpu.dynamic_rotate %0 by %c382_i32 dim 1 : vector<8x384xf32>, i32 -> vector<8x384xf32>
    %12 = vector.extract_strided_slice %11 {offsets = [0, 0], sizes = [8, 256], strides = [1, 1]} : vector<8x384xf32> to vector<8x256xf32>
    %c0_4 = arith.constant 0 : index
    %c2 = arith.constant 2 : index
    %13 = vector.load %arg1[%c0_4, %c2] : memref<8x16xf32, #tpu.memory_space<vmem>>, vector<8x1xf32>
    %14 = vector.broadcast %13 : vector<8x1xf32> to vector<8x256xf32>
    %15 = arith.mulf %14, %12 : vector<8x256xf32>
    %16 = arith.addf %10, %15 : vector<8x256xf32>
    %c381_i32 = arith.constant 381 : i32
    %17 = tpu.dynamic_rotate %0 by %c381_i32 dim 1 : vector<8x384xf32>, i32 -> vector<8x384xf32>
    %18 = vector.extract_strided_slice %17 {offsets = [0, 0], sizes = [8, 256], strides = [1, 1]} : vector<8x384xf32> to vector<8x256xf32>
    %c0_5 = arith.constant 0 : index
    %c3 = arith.constant 3 : index
    %19 = vector.load %arg1[%c0_5, %c3] : memref<8x16xf32, #tpu.memory_space<vmem>>, vector<8x1xf32>
    %20 = vector.broadcast %19 : vector<8x1xf32> to vector<8x256xf32>
    %21 = arith.mulf %20, %18 : vector<8x256xf32>
    %22 = arith.addf %16, %21 : vector<8x256xf32>
    %c380_i32 = arith.constant 380 : i32
    %23 = tpu.dynamic_rotate %0 by %c380_i32 dim 1 : vector<8x384xf32>, i32 -> vector<8x384xf32>
    %24 = vector.extract_strided_slice %23 {offsets = [0, 0], sizes = [8, 256], strides = [1, 1]} : vector<8x384xf32> to vector<8x256xf32>
    %c0_6 = arith.constant 0 : index
    %c4 = arith.constant 4 : index
    %25 = vector.load %arg1[%c0_6, %c4] : memref<8x16xf32, #tpu.memory_space<vmem>>, vector<8x1xf32>
    %26 = vector.broadcast %25 : vector<8x1xf32> to vector<8x256xf32>
    %27 = arith.mulf %26, %24 : vector<8x256xf32>
    %28 = arith.addf %22, %27 : vector<8x256xf32>
    %c379_i32 = arith.constant 379 : i32
    %29 = tpu.dynamic_rotate %0 by %c379_i32 dim 1 : vector<8x384xf32>, i32 -> vector<8x384xf32>
    %30 = vector.extract_strided_slice %29 {offsets = [0, 0], sizes = [8, 256], strides = [1, 1]} : vector<8x384xf32> to vector<8x256xf32>
    %c0_7 = arith.constant 0 : index
    %c5 = arith.constant 5 : index
    %31 = vector.load %arg1[%c0_7, %c5] : memref<8x16xf32, #tpu.memory_space<vmem>>, vector<8x1xf32>
    %32 = vector.broadcast %31 : vector<8x1xf32> to vector<8x256xf32>
    %33 = arith.mulf %32, %30 : vector<8x256xf32>
    %34 = arith.addf %28, %33 : vector<8x256xf32>
    %c378_i32 = arith.constant 378 : i32
    %35 = tpu.dynamic_rotate %0 by %c378_i32 dim 1 : vector<8x384xf32>, i32 -> vector<8x384xf32>
    %36 = vector.extract_strided_slice %35 {offsets = [0, 0], sizes = [8, 256], strides = [1, 1]} : vector<8x384xf32> to vector<8x256xf32>
    %c0_8 = arith.constant 0 : index
    %c6 = arith.constant 6 : index
    %37 = vector.load %arg1[%c0_8, %c6] : memref<8x16xf32, #tpu.memory_space<vmem>>, vector<8x1xf32>
    %38 = vector.broadcast %37 : vector<8x1xf32> to vector<8x256xf32>
    %39 = arith.mulf %38, %36 : vector<8x256xf32>
    %40 = arith.addf %34, %39 : vector<8x256xf32>
    %c377_i32 = arith.constant 377 : i32
    %41 = tpu.dynamic_rotate %0 by %c377_i32 dim 1 : vector<8x384xf32>, i32 -> vector<8x384xf32>
    %42 = vector.extract_strided_slice %41 {offsets = [0, 0], sizes = [8, 256], strides = [1, 1]} : vector<8x384xf32> to vector<8x256xf32>
    %c0_9 = arith.constant 0 : index
    %c7 = arith.constant 7 : index
    %43 = vector.load %arg1[%c0_9, %c7] : memref<8x16xf32, #tpu.memory_space<vmem>>, vector<8x1xf32>
    %44 = vector.broadcast %43 : vector<8x1xf32> to vector<8x256xf32>
    %45 = arith.mulf %44, %42 : vector<8x256xf32>
    %46 = arith.addf %40, %45 : vector<8x256xf32>
    %c376_i32 = arith.constant 376 : i32
    %47 = tpu.dynamic_rotate %0 by %c376_i32 dim 1 : vector<8x384xf32>, i32 -> vector<8x384xf32>
    %48 = vector.extract_strided_slice %47 {offsets = [0, 0], sizes = [8, 256], strides = [1, 1]} : vector<8x384xf32> to vector<8x256xf32>
    %c0_10 = arith.constant 0 : index
    %c8 = arith.constant 8 : index
    %49 = vector.load %arg1[%c0_10, %c8] : memref<8x16xf32, #tpu.memory_space<vmem>>, vector<8x1xf32>
    %50 = vector.broadcast %49 : vector<8x1xf32> to vector<8x256xf32>
    %51 = arith.mulf %50, %48 : vector<8x256xf32>
    %52 = arith.addf %46, %51 : vector<8x256xf32>
    %c375_i32 = arith.constant 375 : i32
    %53 = tpu.dynamic_rotate %0 by %c375_i32 dim 1 : vector<8x384xf32>, i32 -> vector<8x384xf32>
    %54 = vector.extract_strided_slice %53 {offsets = [0, 0], sizes = [8, 256], strides = [1, 1]} : vector<8x384xf32> to vector<8x256xf32>
    %c0_11 = arith.constant 0 : index
    %c9 = arith.constant 9 : index
    %55 = vector.load %arg1[%c0_11, %c9] : memref<8x16xf32, #tpu.memory_space<vmem>>, vector<8x1xf32>
    %56 = vector.broadcast %55 : vector<8x1xf32> to vector<8x256xf32>
    %57 = arith.mulf %56, %54 : vector<8x256xf32>
    %58 = arith.addf %52, %57 : vector<8x256xf32>
    %c374_i32 = arith.constant 374 : i32
    %59 = tpu.dynamic_rotate %0 by %c374_i32 dim 1 : vector<8x384xf32>, i32 -> vector<8x384xf32>
    %60 = vector.extract_strided_slice %59 {offsets = [0, 0], sizes = [8, 256], strides = [1, 1]} : vector<8x384xf32> to vector<8x256xf32>
    %c0_12 = arith.constant 0 : index
    %c10 = arith.constant 10 : index
    %61 = vector.load %arg1[%c0_12, %c10] : memref<8x16xf32, #tpu.memory_space<vmem>>, vector<8x1xf32>
    %62 = vector.broadcast %61 : vector<8x1xf32> to vector<8x256xf32>
    %63 = arith.mulf %62, %60 : vector<8x256xf32>
    %64 = arith.addf %58, %63 : vector<8x256xf32>
    %c373_i32 = arith.constant 373 : i32
    %65 = tpu.dynamic_rotate %0 by %c373_i32 dim 1 : vector<8x384xf32>, i32 -> vector<8x384xf32>
    %66 = vector.extract_strided_slice %65 {offsets = [0, 0], sizes = [8, 256], strides = [1, 1]} : vector<8x384xf32> to vector<8x256xf32>
    %c0_13 = arith.constant 0 : index
    %c11 = arith.constant 11 : index
    %67 = vector.load %arg1[%c0_13, %c11] : memref<8x16xf32, #tpu.memory_space<vmem>>, vector<8x1xf32>
    %68 = vector.broadcast %67 : vector<8x1xf32> to vector<8x256xf32>
    %69 = arith.mulf %68, %66 : vector<8x256xf32>
    %70 = arith.addf %64, %69 : vector<8x256xf32>
    %c372_i32 = arith.constant 372 : i32
    %71 = tpu.dynamic_rotate %0 by %c372_i32 dim 1 : vector<8x384xf32>, i32 -> vector<8x384xf32>
    %72 = vector.extract_strided_slice %71 {offsets = [0, 0], sizes = [8, 256], strides = [1, 1]} : vector<8x384xf32> to vector<8x256xf32>
    %c0_14 = arith.constant 0 : index
    %c12 = arith.constant 12 : index
    %73 = vector.load %arg1[%c0_14, %c12] : memref<8x16xf32, #tpu.memory_space<vmem>>, vector<8x1xf32>
    %74 = vector.broadcast %73 : vector<8x1xf32> to vector<8x256xf32>
    %75 = arith.mulf %74, %72 : vector<8x256xf32>
    %76 = arith.addf %70, %75 : vector<8x256xf32>
    %c371_i32 = arith.constant 371 : i32
    %77 = tpu.dynamic_rotate %0 by %c371_i32 dim 1 : vector<8x384xf32>, i32 -> vector<8x384xf32>
    %78 = vector.extract_strided_slice %77 {offsets = [0, 0], sizes = [8, 256], strides = [1, 1]} : vector<8x384xf32> to vector<8x256xf32>
    %c0_15 = arith.constant 0 : index
    %c13 = arith.constant 13 : index
    %79 = vector.load %arg1[%c0_15, %c13] : memref<8x16xf32, #tpu.memory_space<vmem>>, vector<8x1xf32>
    %80 = vector.broadcast %79 : vector<8x1xf32> to vector<8x256xf32>
    %81 = arith.mulf %80, %78 : vector<8x256xf32>
    %82 = arith.addf %76, %81 : vector<8x256xf32>
    %c370_i32 = arith.constant 370 : i32
    %83 = tpu.dynamic_rotate %0 by %c370_i32 dim 1 : vector<8x384xf32>, i32 -> vector<8x384xf32>
    %84 = vector.extract_strided_slice %83 {offsets = [0, 0], sizes = [8, 256], strides = [1, 1]} : vector<8x384xf32> to vector<8x256xf32>
    %c0_16 = arith.constant 0 : index
    %c14 = arith.constant 14 : index
    %85 = vector.load %arg1[%c0_16, %c14] : memref<8x16xf32, #tpu.memory_space<vmem>>, vector<8x1xf32>
    %86 = vector.broadcast %85 : vector<8x1xf32> to vector<8x256xf32>
    %87 = arith.mulf %86, %84 : vector<8x256xf32>
    %88 = arith.addf %82, %87 : vector<8x256xf32>
    %c369_i32 = arith.constant 369 : i32
    %89 = tpu.dynamic_rotate %0 by %c369_i32 dim 1 : vector<8x384xf32>, i32 -> vector<8x384xf32>
    %90 = vector.extract_strided_slice %89 {offsets = [0, 0], sizes = [8, 256], strides = [1, 1]} : vector<8x384xf32> to vector<8x256xf32>
    %c0_17 = arith.constant 0 : index
    %c15 = arith.constant 15 : index
    %91 = vector.load %arg1[%c0_17, %c15] : memref<8x16xf32, #tpu.memory_space<vmem>>, vector<8x1xf32>
    %92 = vector.broadcast %91 : vector<8x1xf32> to vector<8x256xf32>
    %93 = arith.mulf %92, %90 : vector<8x256xf32>
    %94 = arith.addf %88, %93 : vector<8x256xf32>
    %c0_18 = arith.constant 0 : index
    %c0_19 = arith.constant 0 : index
    %95 = vector.load %arg3[%c0_18, %c0_19] : memref<8x256xf32, #tpu.memory_space<vmem>>, vector<8x256xf32>
    tpu.vector_store %arg3[%c0_18, %c0_19], %94 {strides = array<i32>} : memref<8x256xf32, #tpu.memory_space<vmem>>, vector<8x256xf32>,
    return
  }
  func.func @transform_0(%arg0: i32) -> (i32, i32) {
    %c0_i32 = arith.constant 0 : i32
    %c0_i32_0 = arith.constant 0 : i32
    %c0_i32_1 = arith.constant 0 : i32
    return %c0_i32, %c0_i32_0 : i32, i32
  }
  func.func @transform_1(%arg0: i32) -> (i32, i32) {
    %c0_i32 = arith.constant 0 : i32
    %c0_i32_0 = arith.constant 0 : i32
    %c0_i32_1 = arith.constant 0 : i32
    return %c0_i32, %c0_i32_0 : i32, i32
  }
  func.func @transform_2(%arg0: i32) -> (i32, i32) {
    %c0_i32 = arith.constant 0 : i32
    %c0_i32_0 = arith.constant 0 : i32
    %c0_i32_1 = arith.constant 0 : i32
    return %c0_i32, %c0_i32_0 : i32, i32
  }
}

</mosaic_0001>

<llo_original>
// kernel: tpu_custom_call.1
$region0: #{tpu_custom_call.1}
  #allocation0 [shape = 'u32[]', space=smem, size = 0x4, offset = 0x4, fixed_abs, tag = 'smem constant byte address 0x4 - core index']
  #allocation1 [shape = 'u32[144,128]{1,0:T(1,128)}', space=vmem, size = 0x12000, scoped, tag = 'internal scratch']
  %s0 = inlined_call_operand.hbm [shape: f32[8,16], index: 0, kind: input, shape index: {}]
  %s1 = inlined_call_operand.hbm [shape: f32[8,384], index: 1, kind: input, shape index: {}]
  %s2 = inlined_call_operand.hbm [shape: f32[8,256], index: 2, kind: output, shape index: {}]
  %s3 = sld [smem:[#allocation0]]
  $region26: #{tpu_custom_call.1} parent=0
    _
  %s5 = ssub.s32 1, %s3
  %s6 = scalar_select 0, %s5, %s3
  $region1: #{tpu_custom_call.1} parent=0
    #allocation2 [shape = 'u8[4096]{0}', space=vmem, size = 0x1000, scoped, tag = 'input window, operand 0, single buffered']
    #allocation3 [shape = 's32[1]{0}', space=sflag, size = 0x4, scoped, tag = 'scoped memory for tpu_custom_call.1']
    #allocation4 [shape = 's32[1]{0}', space=sflag, size = 0x4, scoped, tag = 'scoped memory for tpu_custom_call.1']
    #allocation5 [shape = 'u8[12288]{0}', space=vmem, size = 0x3000, scoped, tag = 'input window, operand 1, single buffered']
    #allocation6 [shape = 's32[1]{0}', space=sflag, size = 0x4, scoped, tag = 'scoped memory for tpu_custom_call.1']
    #allocation7 [shape = 'u8[8192]{0}', space=vmem, size = 0x2000, scoped, tag = 'output window, operand 0, single buffered']
    %7 = vsyncpa [#allocation3], 0
    %8 = vsyncpa [#allocation6], 0
    %9 = vsyncpa [#allocation4], 0
    // Predicated region
    $region2: #{tpu_custom_call.1} parent=1 // pred_check
      _
    $region3: #{tpu_custom_call.1} parent=1 // pred_check_branch
      %11 = sbr.rel (0) target = $region5
    $region4: #{tpu_custom_call.1} parent=1 // pred_region
      %s13 = ssub.s32 128, 128
      %14 = vsyncadd [#allocation3], %s13
      %s16 = sshll.u32 [#allocation2], 4
      %s17 = int_to_ptr.vmem [resolvable:$true] %s16
      %19 = dma.hbm_to_vmem [thread:$0]  %s0, 128, %s17, [#allocation3]
    $region5: #{tpu_custom_call.1} parent=1 // pred_fallthru
      _
    // Predicated region
    $region6: #{tpu_custom_call.1} parent=1 // pred_check
      _
    $region7: #{tpu_custom_call.1} parent=1 // pred_check_branch
      %21 = sbr.rel (0) target = $region9
    $region8: #{tpu_custom_call.1} parent=1 // pred_region
      %s23 = ssub.s32 384, 384
      %24 = vsyncadd [#allocation6], %s23
      %s26 = sshll.u32 [#allocation5], 4
      %s27 = int_to_ptr.vmem [resolvable:$true] %s26
      %29 = dma.hbm_to_vmem [thread:$0]  %s1, 384, %s27, [#allocation6]
    $region9: #{tpu_custom_call.1} parent=1 // pred_fallthru
      _
    // Predicated region
    $region10: #{tpu_custom_call.1} parent=1 // pred_check
      _
    $region11: #{tpu_custom_call.1} parent=1 // pred_check_branch
      %31 = sbr.rel (0) target = $region13
    $region12: #{tpu_custom_call.1} parent=1 // pred_region
      %32 = dma.done [#allocation3], 128
    $region13: #{tpu_custom_call.1} parent=1 // pred_fallthru
      _
    // Predicated region
    $region14: #{tpu_custom_call.1} parent=1 // pred_check
      _
    $region15: #{tpu_custom_call.1} parent=1 // pred_check_branch
      %34 = sbr.rel (0) target = $region17
    $region16: #{tpu_custom_call.1} parent=1 // pred_region
      %35 = dma.done [#allocation6], 384
    $region17: #{tpu_custom_call.1} parent=1 // pred_fallthru
      _
    %v36 = vld [vmem:[#allocation5] sm:$0xff]
    %v37 = vld [vmem:[#allocation5 + $0x8] sm:$0xff]
    %v38 = vld [vmem:[#allocation5 + $0x10] sm:$0xff]
    %v39 = vld [vmem:[#allocation2] sm:$0xff]
    %41 = vset.pattern.permute.xlu0 0
    %42 = vperm.xlu0 %41, %v39
    %v43 = vpop.permute.xlu0 %42
    %v45 = vmul.f32 %v43, %v36
    %v46 = vmul.f32 %v43, %v37
    %47 = vrot.lane.b32.xlu0 %v36, 127
    %v48 = vpop.permute.xlu0 %47
    %49 = vrot.lane.b32.xlu0 %v37, 127
    %v50 = vpop.permute.xlu0 %49
    %51 = vrot.lane.b32.xlu0 %v38, 127
    %v52 = vpop.permute.xlu0 %51
    %v53 = vlaneseq
    %v54 = vand.u32 %v53, 127
    %vm55 = vcmp.lt.s32.totalorder %v54, 127
    %v56 = vsel %vm55, %v50, %v52
    %v57 = vsel %vm55, %v48, %v50
    %58 = vset.pattern.permute.xlu0 1
    %59 = vperm.xlu0 %58, %v39
    %v60 = vpop.permute.xlu0 %59
    %v62 = vmul.f32 %v60, %v57
    %v63 = vmul.f32 %v60, %v56
    %v64 = vadd.f32 %v45, %v62
    %v65 = vadd.f32 %v46, %v63
    %66 = vrot.lane.b32.xlu0 %v36, 126
    %v67 = vpop.permute.xlu0 %66
    %68 = vrot.lane.b32.xlu0 %v37, 126
    %v69 = vpop.permute.xlu0 %68
    %70 = vrot.lane.b32.xlu0 %v38, 126
    %v71 = vpop.permute.xlu0 %70
    %vm72 = vcmp.lt.s32.totalorder %v54, 126
    %v73 = vsel %vm72, %v69, %v71
    %v74 = vsel %vm72, %v67, %v69
    %75 = vset.pattern.permute.xlu0 2
    %76 = vperm.xlu0 %75, %v39
    %v77 = vpop.permute.xlu0 %76
    %v79 = vmul.f32 %v77, %v74
    %v80 = vmul.f32 %v77, %v73
    %v81 = vadd.f32 %v64, %v79
    %v82 = vadd.f32 %v65, %v80
    %83 = vrot.lane.b32.xlu0 %v36, 125
    %v84 = vpop.permute.xlu0 %83
    %85 = vrot.lane.b32.xlu0 %v37, 125
    %v86 = vpop.permute.xlu0 %85
    %87 = vrot.lane.b32.xlu0 %v38, 125
    %v88 = vpop.permute.xlu0 %87
    %vm89 = vcmp.lt.s32.totalorder %v54, 125
    %v90 = vsel %vm89, %v86, %v88
    %v91 = vsel %vm89, %v84, %v86
    %92 = vset.pattern.permute.xlu0 3
    %93 = vperm.xlu0 %92, %v39
    %v94 = vpop.permute.xlu0 %93
    %v96 = vmul.f32 %v94, %v91
    %v97 = vmul.f32 %v94, %v90
    %v98 = vadd.f32 %v81, %v96
    %v99 = vadd.f32 %v82, %v97
    %100 = vrot.lane.b32.xlu0 %v36, 124
    %v101 = vpop.permute.xlu0 %100
    %102 = vrot.lane.b32.xlu0 %v37, 124
    %v103 = vpop.permute.xlu0 %102
    %104 = vrot.lane.b32.xlu0 %v38, 124
    %v105 = vpop.permute.xlu0 %104
    %vm106 = vcmp.lt.s32.totalorder %v54, 124
    %v107 = vsel %vm106, %v103, %v105
    %v108 = vsel %vm106, %v101, %v103
    %109 = vset.pattern.permute.xlu0 4
    %110 = vperm.xlu0 %109, %v39
    %v111 = vpop.permute.xlu0 %110
    %v113 = vmul.f32 %v111, %v108
    %v114 = vmul.f32 %v111, %v107
    %v115 = vadd.f32 %v98, %v113
    %v116 = vadd.f32 %v99, %v114
    %117 = vrot.lane.b32.xlu0 %v36, 123
    %v118 = vpop.permute.xlu0 %117
    %119 = vrot.lane.b32.xlu0 %v37, 123
    %v120 = vpop.permute.xlu0 %119
    %121 = vrot.lane.b32.xlu0 %v38, 123
    %v122 = vpop.permute.xlu0 %121
    %vm123 = vcmp.lt.s32.totalorder %v54, 123
    %v124 = vsel %vm123, %v120, %v122
    %v125 = vsel %vm123, %v118, %v120
    %126 = vset.pattern.permute.xlu0 5
    %127 = vperm.xlu0 %126, %v39
    %v128 = vpop.permute.xlu0 %127
    %v130 = vmul.f32 %v128, %v125
    %v131 = vmul.f32 %v128, %v124
    %v132 = vadd.f32 %v115, %v130
    %v133 = vadd.f32 %v116, %v131
    %134 = vrot.lane.b32.xlu0 %v36, 122
    %v135 = vpop.permute.xlu0 %134
    %136 = vrot.lane.b32.xlu0 %v37, 122
    %v137 = vpop.permute.xlu0 %136
    %138 = vrot.lane.b32.xlu0 %v38, 122
    %v139 = vpop.permute.xlu0 %138
    %vm140 = vcmp.lt.s32.totalorder %v54, 122
    %v141 = vsel %vm140, %v137, %v139
    %v142 = vsel %vm140, %v135, %v137
    %143 = vset.pattern.permute.xlu0 6
    %144 = vperm.xlu0 %143, %v39
    %v145 = vpop.permute.xlu0 %144
    %v147 = vmul.f32 %v145, %v142
    %v148 = vmul.f32 %v145, %v141
    %v149 = vadd.f32 %v132, %v147
    %v150 = vadd.f32 %v133, %v148
    %151 = vrot.lane.b32.xlu0 %v36, 121
    %v152 = vpop.permute.xlu0 %151
    %153 = vrot.lane.b32.xlu0 %v37, 121
    %v154 = vpop.permute.xlu0 %153
    %155 = vrot.lane.b32.xlu0 %v38, 121
    %v156 = vpop.permute.xlu0 %155
    %vm157 = vcmp.lt.s32.totalorder %v54, 121
    %v158 = vsel %vm157, %v154, %v156
    %v159 = vsel %vm157, %v152, %v154
    %160 = vset.pattern.permute.xlu0 7
    %161 = vperm.xlu0 %160, %v39
    %v162 = vpop.permute.xlu0 %161
    %v164 = vmul.f32 %v162, %v159
    %v165 = vmul.f32 %v162, %v158
    %v166 = vadd.f32 %v149, %v164
    %v167 = vadd.f32 %v150, %v165
    %168 = vrot.lane.b32.xlu0 %v36, 120
    %v169 = vpop.permute.xlu0 %168
    %170 = vrot.lane.b32.xlu0 %v37, 120
    %v171 = vpop.permute.xlu0 %170
    %172 = vrot.lane.b32.xlu0 %v38, 120
    %v173 = vpop.permute.xlu0 %172
    %vm174 = vcmp.lt.s32.totalorder %v54, 120
    %v175 = vsel %vm174, %v171, %v173
    %v176 = vsel %vm174, %v169, %v171
    %177 = vset.pattern.permute.xlu0 8
    %178 = vperm.xlu0 %177, %v39
    %v179 = vpop.permute.xlu0 %178
    %v181 = vmul.f32 %v179, %v176
    %v182 = vmul.f32 %v179, %v175
    %v183 = vadd.f32 %v166, %v181
    %v184 = vadd.f32 %v167, %v182
    %185 = vrot.lane.b32.xlu0 %v36, 119
    %v186 = vpop.permute.xlu0 %185
    %187 = vrot.lane.b32.xlu0 %v37, 119
    %v188 = vpop.permute.xlu0 %187
    %189 = vrot.lane.b32.xlu0 %v38, 119
    %v190 = vpop.permute.xlu0 %189
    %vm191 = vcmp.lt.s32.totalorder %v54, 119
    %v192 = vsel %vm191, %v188, %v190
    %v193 = vsel %vm191, %v186, %v188
    %194 = vset.pattern.permute.xlu0 9
    %195 = vperm.xlu0 %194, %v39
    %v196 = vpop.permute.xlu0 %195
    %v198 = vmul.f32 %v196, %v193
    %v199 = vmul.f32 %v196, %v192
    %v200 = vadd.f32 %v183, %v198
    %v201 = vadd.f32 %v184, %v199
    %202 = vrot.lane.b32.xlu0 %v36, 118
    %v203 = vpop.permute.xlu0 %202
    %204 = vrot.lane.b32.xlu0 %v37, 118
    %v205 = vpop.permute.xlu0 %204
    %206 = vrot.lane.b32.xlu0 %v38, 118
    %v207 = vpop.permute.xlu0 %206
    %vm208 = vcmp.lt.s32.totalorder %v54, 118
    %v209 = vsel %vm208, %v205, %v207
    %v210 = vsel %vm208, %v203, %v205
    %211 = vset.pattern.permute.xlu0 10
    %212 = vperm.xlu0 %211, %v39
    %v213 = vpop.permute.xlu0 %212
    %v215 = vmul.f32 %v213, %v210
    %v216 = vmul.f32 %v213, %v209
    %v217 = vadd.f32 %v200, %v215
    %v218 = vadd.f32 %v201, %v216
    %219 = vrot.lane.b32.xlu0 %v36, 117
    %v220 = vpop.permute.xlu0 %219
    %221 = vrot.lane.b32.xlu0 %v37, 117
    %v222 = vpop.permute.xlu0 %221
    %223 = vrot.lane.b32.xlu0 %v38, 117
    %v224 = vpop.permute.xlu0 %223
    %vm225 = vcmp.lt.s32.totalorder %v54, 117
    %v226 = vsel %vm225, %v222, %v224
    %v227 = vsel %vm225, %v220, %v222
    %228 = vset.pattern.permute.xlu0 11
    %229 = vperm.xlu0 %228, %v39
    %v230 = vpop.permute.xlu0 %229
    %v232 = vmul.f32 %v230, %v227
    %v233 = vmul.f32 %v230, %v226
    %v234 = vadd.f32 %v217, %v232
    %v235 = vadd.f32 %v218, %v233
    %236 = vrot.lane.b32.xlu0 %v36, 116
    %v237 = vpop.permute.xlu0 %236
    %238 = vrot.lane.b32.xlu0 %v37, 116
    %v239 = vpop.permute.xlu0 %238
    %240 = vrot.lane.b32.xlu0 %v38, 116
    %v241 = vpop.permute.xlu0 %240
    %vm242 = vcmp.lt.s32.totalorder %v54, 116
    %v243 = vsel %vm242, %v239, %v241
    %v244 = vsel %vm242, %v237, %v239
    %245 = vset.pattern.permute.xlu0 12
    %246 = vperm.xlu0 %245, %v39
    %v247 = vpop.permute.xlu0 %246
    %v249 = vmul.f32 %v247, %v244
    %v250 = vmul.f32 %v247, %v243
    %v251 = vadd.f32 %v234, %v249
    %v252 = vadd.f32 %v235, %v250
    %253 = vrot.lane.b32.xlu0 %v36, 115
    %v254 = vpop.permute.xlu0 %253
    %255 = vrot.lane.b32.xlu0 %v37, 115
    %v256 = vpop.permute.xlu0 %255
    %257 = vrot.lane.b32.xlu0 %v38, 115
    %v258 = vpop.permute.xlu0 %257
    %vm259 = vcmp.lt.s32.totalorder %v54, 115
    %v260 = vsel %vm259, %v256, %v258
    %v261 = vsel %vm259, %v254, %v256
    %262 = vset.pattern.permute.xlu0 13
    %263 = vperm.xlu0 %262, %v39
    %v264 = vpop.permute.xlu0 %263
    %v266 = vmul.f32 %v264, %v261
    %v267 = vmul.f32 %v264, %v260
    %v268 = vadd.f32 %v251, %v266
    %v269 = vadd.f32 %v252, %v267
    %270 = vrot.lane.b32.xlu0 %v36, 114
    %v271 = vpop.permute.xlu0 %270
    %272 = vrot.lane.b32.xlu0 %v37, 114
    %v273 = vpop.permute.xlu0 %272
    %274 = vrot.lane.b32.xlu0 %v38, 114
    %v275 = vpop.permute.xlu0 %274
    %vm276 = vcmp.lt.s32.totalorder %v54, 114
    %v277 = vsel %vm276, %v273, %v275
    %v278 = vsel %vm276, %v271, %v273
    %279 = vset.pattern.permute.xlu0 14
    %280 = vperm.xlu0 %279, %v39
    %v281 = vpop.permute.xlu0 %280
    %v283 = vmul.f32 %v281, %v278
    %v284 = vmul.f32 %v281, %v277
    %v285 = vadd.f32 %v268, %v283
    %v286 = vadd.f32 %v269, %v284
    %287 = vrot.lane.b32.xlu0 %v36, 113
    %v288 = vpop.permute.xlu0 %287
    %289 = vrot.lane.b32.xlu0 %v37, 113
    %v290 = vpop.permute.xlu0 %289
    %291 = vrot.lane.b32.xlu0 %v38, 113
    %v292 = vpop.permute.xlu0 %291
    %vm293 = vcmp.lt.s32.totalorder %v54, 113
    %v294 = vsel %vm293, %v290, %v292
    %v295 = vsel %vm293, %v288, %v290
    %296 = vset.pattern.permute.xlu0 15
    %297 = vperm.xlu0 %296, %v39
    %v298 = vpop.permute.xlu0 %297
    %v300 = vmul.f32 %v298, %v295
    %v301 = vmul.f32 %v298, %v294
    %v302 = vadd.f32 %v285, %v300
    %v303 = vadd.f32 %v286, %v301
    %304 = vst [vmem:[#allocation7] sm:$0xff] %v302
    %305 = vst [vmem:[#allocation7 + $0x8] sm:$0xff] %v303
    // Predicated region
    $region18: #{tpu_custom_call.1} parent=1 // pred_check
      _
    $region19: #{tpu_custom_call.1} parent=1 // pred_check_branch
      %307 = sbr.rel (0) target = $region21
    $region20: #{tpu_custom_call.1} parent=1 // pred_region
      %s309 = ssub.s32 256, 256
      %310 = vsyncadd [#allocation4], %s309
      %s312 = sshll.u32 [#allocation7], 4
      %s313 = int_to_ptr.vmem [resolvable:$true] %s312
      %315 = dma.vmem_to_hbm [thread:$0]  %s313, 256, %s2, [#allocation4]
    $region21: #{tpu_custom_call.1} parent=1 // pred_fallthru
      _
    // Predicated region
    $region22: #{tpu_custom_call.1} parent=1 // pred_check
      _
    $region23: #{tpu_custom_call.1} parent=1 // pred_check_branch
      %317 = sbr.rel (0) target = $region25
    $region24: #{tpu_custom_call.1} parent=1 // pred_region
      %318 = dma.done [#allocation4], 256
    $region25: #{tpu_custom_call.1} parent=1 // pred_fallthru
      _
    %319 = vsyncpa [#allocation3], 1
    %320 = vsyncpa [#allocation6], 1
    %321 = vsyncpa [#allocation4], 1

</llo_original>
